<compile_context>
chip_gen: v7x
topology: tpu7x:2x2x1
jax: 0.10.0
libtpu: 0.0.40
codegen_flags: <defaults>
</compile_context>

<pallas_src>
import jax
import jax.numpy as jnp
from jax.experimental import pallas as pl
from jax.experimental.pallas import tpu as pltpu


LANE = 128      # TPU lane width (last dim)
SUBLANE = 8     # f32 sublane count (second-to-last dim)
TIME_BLOCK = 8  # recurrent steps per grid iteration


def _round_up(x, m):
    return (x + m - 1) // m * m


def _rnn_scan_kernel(xp_ref, whh_ref, out_ref, h_ref):
    """One grid step = TIME_BLOCK recurrent steps.

    xp_ref : (Tt, Bp, Hp)  precomputed x_t @ W_ih^T + bias, time-major, zero-padded
    whh_ref: (Hp, Hp)      W_hh^T, zero-padded
    out_ref: (Tt, Bp, Hp)  per-step hidden states, time-major
    h_ref  : (Bp, Hp)      VMEM carry of the recurrent state across grid steps
    """
    @pl.when(pl.program_id(0) == 0)
    def _():
        h_ref[...] = jnp.zeros_like(h_ref)

    whh = whh_ref[...]
    h = h_ref[...]
    # Fully-unrolled inner time loop: h stays in registers, one small MXU matmul +
    # EUP tanh per step, full-slab lane-dense (Bp, Hp) stores.
    for i in range(xp_ref.shape[0]):
        h = jnp.tanh(xp_ref[i] +
                     jnp.dot(h, whh, preferred_element_type=jnp.float32))
        out_ref[i] = h
    h_ref[...] = h


def encoder_forward(tokens, params):
    """tokens: int32 (B, T).  Returns (output (B, T, H_enc), hidden (1, B, H_dec))."""
    emb_table = params["embedding"]          # (vocab, E)
    w_ih = params["w_ih"]                    # (H_enc, E)   (PyTorch layout)
    w_hh = params["w_hh"]                    # (H_enc, H_enc)
    b_ih = params["b_ih"]                    # (H_enc,)
    b_hh = params["b_hh"]                    # (H_enc,)
    fc_w = params["fc_w"]                    # (H_dec, H_enc)
    fc_b = params["fc_b"]                    # (H_dec,)

    B, T = tokens.shape
    H_enc = w_hh.shape[0]

    # ---- non-recurrent part, hoisted out of the serial loop (plain-XLA glue) ----
    # Time-major embedding gather (dropout = identity in eval) and one large parallel
    # matmul for the input projection with both biases folded in.
    emb_tm = jnp.take(emb_table, tokens.T, axis=0)                     # (T, B, E)
    xp = jnp.dot(emb_tm, w_ih.T,
                 preferred_element_type=jnp.float32) + (b_ih + b_hh)   # (T, B, H_enc)

    # ---- pad to TPU-friendly shapes (lane-dense H, full sublanes on B) ----
    Hp = _round_up(H_enc, LANE)
    Bp = _round_up(B, SUBLANE)
    Tt = TIME_BLOCK
    Tp = _round_up(T, Tt)

    xp_p = jnp.pad(xp, ((0, Tp - T), (0, Bp - B), (0, Hp - H_enc)))    # zeros in padding
    whh_p = jnp.pad(jnp.transpose(w_hh), ((0, Hp - H_enc), (0, Hp - H_enc)))

    out_tm_p = pl.pallas_call(
        _rnn_scan_kernel,
        out_shape=jax.ShapeDtypeStruct((Tp, Bp, Hp), jnp.float32),
        grid_spec=pltpu.PrefetchScalarGridSpec(
            num_scalar_prefetch=0,
            grid=(Tp // Tt,),
            in_specs=[
                pl.BlockSpec((Tt, Bp, Hp), lambda tb: (tb, 0, 0)),     # XP block (time-major)
                pl.BlockSpec((Hp, Hp), lambda tb: (0, 0)),             # W_hh^T (resident)
            ],
            out_specs=pl.BlockSpec((Tt, Bp, Hp), lambda tb: (tb, 0, 0)),
            scratch_shapes=[pltpu.VMEM((Bp, Hp), jnp.float32)],        # recurrent carry
        ),
        compiler_params=pltpu.CompilerParams(
            dimension_semantics=("arbitrary",),   # time recurrence is inherently sequential
        ),
    )(xp_p, whh_p)

    # Slice off padding; batch-first output (nn.RNN(batch_first=True) convention).
    output = jnp.transpose(out_tm_p[:T, :B, :H_enc], (1, 0, 2))        # (B, T, H_enc)

    # Final encoder->decoder hidden projection: tiny one-off matmul in the wrapper so the
    # fc weights do not sit (double-buffered) in VMEM for the entire time scan.
    h_last = out_tm_p[T - 1, :B, :H_enc]                               # (B, H_enc)
    hidden = jnp.tanh(jnp.dot(h_last, fc_w.T,
                              preferred_element_type=jnp.float32) + fc_b)[None]  # (1, B, H_dec)
    return output, hidden


def init_params(key, input_size, emb_size, enc_hidden, dec_hidden):
    ks = jax.random.split(key, 7)
    s = lambda n: 1.0 / jnp.sqrt(jnp.float32(n))
    return {
        "embedding": jax.random.normal(ks[0], (input_size, emb_size), jnp.float32) * 0.1,
        "w_ih": jax.random.uniform(ks[1], (enc_hidden, emb_size), jnp.float32,
                                   -s(enc_hidden), s(enc_hidden)),
        "w_hh": jax.random.uniform(ks[2], (enc_hidden, enc_hidden), jnp.float32,
                                   -s(enc_hidden), s(enc_hidden)),
        "b_ih": jax.random.uniform(ks[3], (enc_hidden,), jnp.float32,
                                   -s(enc_hidden), s(enc_hidden)),
        "b_hh": jax.random.uniform(ks[4], (enc_hidden,), jnp.float32,
                                   -s(enc_hidden), s(enc_hidden)),
        "fc_w": jax.random.uniform(ks[5], (dec_hidden, enc_hidden), jnp.float32,
                                   -s(enc_hidden), s(enc_hidden)),
        "fc_b": jax.random.uniform(ks[6], (dec_hidden,), jnp.float32,
                                   -s(enc_hidden), s(enc_hidden)),
    }


def _reference_forward(tokens, params):
    """Pure-JAX reference of the same encoder, for a sanity check."""
    emb = jnp.take(params["embedding"], tokens, axis=0)        # (B, T, E)
    B, T, E = emb.shape
    H = params["w_hh"].shape[0]
    h = jnp.zeros((B, H), jnp.float32)
    outs = []
    for t in range(T):
        h = jnp.tanh(emb[:, t, :] @ params["w_ih"].T + params["b_ih"]
                     + h @ params["w_hh"].T + params["b_hh"])
        outs.append(h)
    output = jnp.stack(outs, axis=1)
    hidden = jnp.tanh(h @ params["fc_w"].T + params["fc_b"])[None]
    return output, hidden


if __name__ == "__main__":
    # Small, deterministic config.
    input_size = 20      # vocab
    emb_size = 32
    encoder_hidden_size = 32
    decoder_hidden_size = 32
    batch = 4
    seq_len = 8

    key = jax.random.PRNGKey(0)
    k_param, k_tok = jax.random.split(key)
    params = init_params(k_param, input_size, emb_size,
                         encoder_hidden_size, decoder_hidden_size)
    tokens = jax.random.randint(k_tok, (batch, seq_len), 0, input_size, dtype=jnp.int32)

    output, hidden = encoder_forward(tokens, params)
    output = jax.block_until_ready(output)
    hidden = jax.block_until_ready(hidden)

    # Sanity check vs. pure-JAX reference.
    ref_out, ref_hid = _reference_forward(tokens, params)
    assert output.shape == (batch, seq_len, encoder_hidden_size)
    assert hidden.shape == (1, batch, decoder_hidden_size)
    assert jnp.allclose(output, ref_out, atol=1e-5, rtol=1e-5)
    assert jnp.allclose(hidden, ref_hid, atol=1e-5, rtol=1e-5)

    print("KERNEL_OK")
</pallas_src>

<mosaic_0001>
module attributes {stable_mosaic.version = 11 : i64} {
  func.func @_rnn_scan_kernel(%arg0: i32, %arg1: memref<8x8x128xf32, #tpu.memory_space<vmem>>, %arg2: memref<128x128xf32, #tpu.memory_space<vmem>>, %arg3: memref<8x8x128xf32, #tpu.memory_space<vmem>>, %arg4: memref<8x128xf32, #tpu.memory_space<vmem>>) attributes {dimension_semantics = [#tpu.dimension_semantics<arbitrary>], iteration_bounds = array<i64: 1>, scalar_prefetch = 0 : i64, scratch_operands = 1 : i64, tpu.core_type = #tpu.core_type<tc>, window_params = [{transform_indices = @transform_0, window_bounds = array<i64: 8, 8, 128>}, {pipeline_mode = #tpu.pipeline_mode<synchronous>, transform_indices = @transform_1, window_bounds = array<i64: 128, 128>}, {transform_indices = @transform_2, window_bounds = array<i64: 8, 8, 128>}]} {
    %c0_i32 = arith.constant 0 : i32
    %0 = arith.cmpi eq, %arg0, %c0_i32 : i32
    %1 = arith.extui %0 : i1 to i32
    %c0_i32_0 = arith.constant 0 : i32
    %2 = arith.cmpi ne, %1, %c0_i32_0 : i32
    scf.if %2 {
      %cst_54 = arith.constant 0.000000e+00 : f32
      %70 = vector.broadcast %cst_54 : f32 to vector<8x128xf32>
      %c0_55 = arith.constant 0 : index
      %c0_56 = arith.constant 0 : index
      %71 = vector.load %arg4[%c0_55, %c0_56] : memref<8x128xf32, #tpu.memory_space<vmem>>, vector<8x128xf32>
      tpu.vector_store %arg4[%c0_55, %c0_56], %70 {strides = array<i32>} : memref<8x128xf32, #tpu.memory_space<vmem>>, vector<8x128xf32>,
    } else {
    }
    %c0 = arith.constant 0 : index
    %c0_1 = arith.constant 0 : index
    %3 = vector.load %arg2[%c0, %c0_1] : memref<128x128xf32, #tpu.memory_space<vmem>>, vector<128x128xf32>
    %c0_2 = arith.constant 0 : index
    %c0_3 = arith.constant 0 : index
    %4 = vector.load %arg4[%c0_2, %c0_3] : memref<8x128xf32, #tpu.memory_space<vmem>>, vector<8x128xf32>
    %c0_4 = arith.constant 0 : index
    %c0_5 = arith.constant 0 : index
    %c0_6 = arith.constant 0 : index
    %5 = vector.load %arg1[%c0_4, %c0_5, %c0_6] : memref<8x8x128xf32, #tpu.memory_space<vmem>>, vector<1x8x128xf32>
    %6 = vector.shape_cast %5 : vector<1x8x128xf32> to vector<8x128xf32>
    %cst = arith.constant dense<0.000000e+00> : vector<8x128xf32>
    %7 = tpu.matmul %4, %3, %cst {dimension_numbers = #tpu.dot_dimension_numbers<[1], [0], [0], [1], [0, 0, 1, 1], [], []>} : vector<8x128xf32>, vector<128x128xf32>, vector<8x128xf32> -> vector<8x128xf32>
    %8 = arith.addf %6, %7 : vector<8x128xf32>
    %9 = math.tanh %8 : vector<8x128xf32>
    %c0_7 = arith.constant 0 : index
    %c0_8 = arith.constant 0 : index
    %c0_9 = arith.constant 0 : index
    %10 = vector.load %arg3[%c0_7, %c0_8, %c0_9] : memref<8x8x128xf32, #tpu.memory_space<vmem>>, vector<1x8x128xf32>
    %11 = vector.shape_cast %10 : vector<1x8x128xf32> to vector<8x128xf32>
    %12 = vector.shape_cast %9 : vector<8x128xf32> to vector<1x8x128xf32>
    tpu.vector_store %arg3[%c0_7, %c0_8, %c0_9], %12 {strides = array<i32>} : memref<8x8x128xf32, #tpu.memory_space<vmem>>, vector<1x8x128xf32>,
    %c1 = arith.constant 1 : index
    %c0_10 = arith.constant 0 : index
    %c0_11 = arith.constant 0 : index
    %13 = vector.load %arg1[%c1, %c0_10, %c0_11] : memref<8x8x128xf32, #tpu.memory_space<vmem>>, vector<1x8x128xf32>
    %14 = vector.shape_cast %13 : vector<1x8x128xf32> to vector<8x128xf32>
    %cst_12 = arith.constant dense<0.000000e+00> : vector<8x128xf32>
    %15 = tpu.matmul %9, %3, %cst_12 {dimension_numbers = #tpu.dot_dimension_numbers<[1], [0], [0], [1], [0, 0, 1, 1], [], []>} : vector<8x128xf32>, vector<128x128xf32>, vector<8x128xf32> -> vector<8x128xf32>
    %16 = arith.addf %14, %15 : vector<8x128xf32>
    %17 = math.tanh %16 : vector<8x128xf32>
    %c1_13 = arith.constant 1 : index
    %c0_14 = arith.constant 0 : index
    %c0_15 = arith.constant 0 : index
    %18 = vector.load %arg3[%c1_13, %c0_14, %c0_15] : memref<8x8x128xf32, #tpu.memory_space<vmem>>, vector<1x8x128xf32>
    %19 = vector.shape_cast %18 : vector<1x8x128xf32> to vector<8x128xf32>
    %20 = vector.shape_cast %17 : vector<8x128xf32> to vector<1x8x128xf32>
    tpu.vector_store %arg3[%c1_13, %c0_14, %c0_15], %20 {strides = array<i32>} : memref<8x8x128xf32, #tpu.memory_space<vmem>>, vector<1x8x128xf32>,
    %c2 = arith.constant 2 : index
    %c0_16 = arith.constant 0 : index
    %c0_17 = arith.constant 0 : index
    %21 = vector.load %arg1[%c2, %c0_16, %c0_17] : memref<8x8x128xf32, #tpu.memory_space<vmem>>, vector<1x8x128xf32>
    %22 = vector.shape_cast %21 : vector<1x8x128xf32> to vector<8x128xf32>
    %cst_18 = arith.constant dense<0.000000e+00> : vector<8x128xf32>
    %23 = tpu.matmul %17, %3, %cst_18 {dimension_numbers = #tpu.dot_dimension_numbers<[1], [0], [0], [1], [0, 0, 1, 1], [], []>} : vector<8x128xf32>, vector<128x128xf32>, vector<8x128xf32> -> vector<8x128xf32>
    %24 = arith.addf %22, %23 : vector<8x128xf32>
    %25 = math.tanh %24 : vector<8x128xf32>
    %c2_19 = arith.constant 2 : index
    %c0_20 = arith.constant 0 : index
    %c0_21 = arith.constant 0 : index
    %26 = vector.load %arg3[%c2_19, %c0_20, %c0_21] : memref<8x8x128xf32, #tpu.memory_space<vmem>>, vector<1x8x128xf32>
    %27 = vector.shape_cast %26 : vector<1x8x128xf32> to vector<8x128xf32>
    %28 = vector.shape_cast %25 : vector<8x128xf32> to vector<1x8x128xf32>
    tpu.vector_store %arg3[%c2_19, %c0_20, %c0_21], %28 {strides = array<i32>} : memref<8x8x128xf32, #tpu.memory_space<vmem>>, vector<1x8x128xf32>,
    %c3 = arith.constant 3 : index
    %c0_22 = arith.constant 0 : index
    %c0_23 = arith.constant 0 : index
    %29 = vector.load %arg1[%c3, %c0_22, %c0_23] : memref<8x8x128xf32, #tpu.memory_space<vmem>>, vector<1x8x128xf32>
    %30 = vector.shape_cast %29 : vector<1x8x128xf32> to vector<8x128xf32>
    %cst_24 = arith.constant dense<0.000000e+00> : vector<8x128xf32>
    %31 = tpu.matmul %25, %3, %cst_24 {dimension_numbers = #tpu.dot_dimension_numbers<[1], [0], [0], [1], [0, 0, 1, 1], [], []>} : vector<8x128xf32>, vector<128x128xf32>, vector<8x128xf32> -> vector<8x128xf32>
    %32 = arith.addf %30, %31 : vector<8x128xf32>
    %33 = math.tanh %32 : vector<8x128xf32>
    %c3_25 = arith.constant 3 : index
    %c0_26 = arith.constant 0 : index
    %c0_27 = arith.constant 0 : index
    %34 = vector.load %arg3[%c3_25, %c0_26, %c0_27] : memref<8x8x128xf32, #tpu.memory_space<vmem>>, vector<1x8x128xf32>
    %35 = vector.shape_cast %34 : vector<1x8x128xf32> to vector<8x128xf32>
    %36 = vector.shape_cast %33 : vector<8x128xf32> to vector<1x8x128xf32>
    tpu.vector_store %arg3[%c3_25, %c0_26, %c0_27], %36 {strides = array<i32>} : memref<8x8x128xf32, #tpu.memory_space<vmem>>, vector<1x8x128xf32>,
    %c4 = arith.constant 4 : index
    %c0_28 = arith.constant 0 : index
    %c0_29 = arith.constant 0 : index
    %37 = vector.load %arg1[%c4, %c0_28, %c0_29] : memref<8x8x128xf32, #tpu.memory_space<vmem>>, vector<1x8x128xf32>
    %38 = vector.shape_cast %37 : vector<1x8x128xf32> to vector<8x128xf32>
    %cst_30 = arith.constant dense<0.000000e+00> : vector<8x128xf32>
    %39 = tpu.matmul %33, %3, %cst_30 {dimension_numbers = #tpu.dot_dimension_numbers<[1], [0], [0], [1], [0, 0, 1, 1], [], []>} : vector<8x128xf32>, vector<128x128xf32>, vector<8x128xf32> -> vector<8x128xf32>
    %40 = arith.addf %38, %39 : vector<8x128xf32>
    %41 = math.tanh %40 : vector<8x128xf32>
    %c4_31 = arith.constant 4 : index
    %c0_32 = arith.constant 0 : index
    %c0_33 = arith.constant 0 : index
    %42 = vector.load %arg3[%c4_31, %c0_32, %c0_33] : memref<8x8x128xf32, #tpu.memory_space<vmem>>, vector<1x8x128xf32>
    %43 = vector.shape_cast %42 : vector<1x8x128xf32> to vector<8x128xf32>
    %44 = vector.shape_cast %41 : vector<8x128xf32> to vector<1x8x128xf32>
    tpu.vector_store %arg3[%c4_31, %c0_32, %c0_33], %44 {strides = array<i32>} : memref<8x8x128xf32, #tpu.memory_space<vmem>>, vector<1x8x128xf32>,
    %c5 = arith.constant 5 : index
    %c0_34 = arith.constant 0 : index
    %c0_35 = arith.constant 0 : index
    %45 = vector.load %arg1[%c5, %c0_34, %c0_35] : memref<8x8x128xf32, #tpu.memory_space<vmem>>, vector<1x8x128xf32>
    %46 = vector.shape_cast %45 : vector<1x8x128xf32> to vector<8x128xf32>
    %cst_36 = arith.constant dense<0.000000e+00> : vector<8x128xf32>
    %47 = tpu.matmul %41, %3, %cst_36 {dimension_numbers = #tpu.dot_dimension_numbers<[1], [0], [0], [1], [0, 0, 1, 1], [], []>} : vector<8x128xf32>, vector<128x128xf32>, vector<8x128xf32> -> vector<8x128xf32>
    %48 = arith.addf %46, %47 : vector<8x128xf32>
    %49 = math.tanh %48 : vector<8x128xf32>
    %c5_37 = arith.constant 5 : index
    %c0_38 = arith.constant 0 : index
    %c0_39 = arith.constant 0 : index
    %50 = vector.load %arg3[%c5_37, %c0_38, %c0_39] : memref<8x8x128xf32, #tpu.memory_space<vmem>>, vector<1x8x128xf32>
    %51 = vector.shape_cast %50 : vector<1x8x128xf32> to vector<8x128xf32>
    %52 = vector.shape_cast %49 : vector<8x128xf32> to vector<1x8x128xf32>
    tpu.vector_store %arg3[%c5_37, %c0_38, %c0_39], %52 {strides = array<i32>} : memref<8x8x128xf32, #tpu.memory_space<vmem>>, vector<1x8x128xf32>,
    %c6 = arith.constant 6 : index
    %c0_40 = arith.constant 0 : index
    %c0_41 = arith.constant 0 : index
    %53 = vector.load %arg1[%c6, %c0_40, %c0_41] : memref<8x8x128xf32, #tpu.memory_space<vmem>>, vector<1x8x128xf32>
    %54 = vector.shape_cast %53 : vector<1x8x128xf32> to vector<8x128xf32>
    %cst_42 = arith.constant dense<0.000000e+00> : vector<8x128xf32>
    %55 = tpu.matmul %49, %3, %cst_42 {dimension_numbers = #tpu.dot_dimension_numbers<[1], [0], [0], [1], [0, 0, 1, 1], [], []>} : vector<8x128xf32>, vector<128x128xf32>, vector<8x128xf32> -> vector<8x128xf32>
    %56 = arith.addf %54, %55 : vector<8x128xf32>
    %57 = math.tanh %56 : vector<8x128xf32>
    %c6_43 = arith.constant 6 : index
    %c0_44 = arith.constant 0 : index
    %c0_45 = arith.constant 0 : index
    %58 = vector.load %arg3[%c6_43, %c0_44, %c0_45] : memref<8x8x128xf32, #tpu.memory_space<vmem>>, vector<1x8x128xf32>
    %59 = vector.shape_cast %58 : vector<1x8x128xf32> to vector<8x128xf32>
    %60 = vector.shape_cast %57 : vector<8x128xf32> to vector<1x8x128xf32>
    tpu.vector_store %arg3[%c6_43, %c0_44, %c0_45], %60 {strides = array<i32>} : memref<8x8x128xf32, #tpu.memory_space<vmem>>, vector<1x8x128xf32>,
    %c7 = arith.constant 7 : index
    %c0_46 = arith.constant 0 : index
    %c0_47 = arith.constant 0 : index
    %61 = vector.load %arg1[%c7, %c0_46, %c0_47] : memref<8x8x128xf32, #tpu.memory_space<vmem>>, vector<1x8x128xf32>
    %62 = vector.shape_cast %61 : vector<1x8x128xf32> to vector<8x128xf32>
    %cst_48 = arith.constant dense<0.000000e+00> : vector<8x128xf32>
    %63 = tpu.matmul %57, %3, %cst_48 {dimension_numbers = #tpu.dot_dimension_numbers<[1], [0], [0], [1], [0, 0, 1, 1], [], []>} : vector<8x128xf32>, vector<128x128xf32>, vector<8x128xf32> -> vector<8x128xf32>
    %64 = arith.addf %62, %63 : vector<8x128xf32>
    %65 = math.tanh %64 : vector<8x128xf32>
    %c7_49 = arith.constant 7 : index
    %c0_50 = arith.constant 0 : index
    %c0_51 = arith.constant 0 : index
    %66 = vector.load %arg3[%c7_49, %c0_50, %c0_51] : memref<8x8x128xf32, #tpu.memory_space<vmem>>, vector<1x8x128xf32>
    %67 = vector.shape_cast %66 : vector<1x8x128xf32> to vector<8x128xf32>
    %68 = vector.shape_cast %65 : vector<8x128xf32> to vector<1x8x128xf32>
    tpu.vector_store %arg3[%c7_49, %c0_50, %c0_51], %68 {strides = array<i32>} : memref<8x8x128xf32, #tpu.memory_space<vmem>>, vector<1x8x128xf32>,
    %c0_52 = arith.constant 0 : index
    %c0_53 = arith.constant 0 : index
    %69 = vector.load %arg4[%c0_52, %c0_53] : memref<8x128xf32, #tpu.memory_space<vmem>>, vector<8x128xf32>
    tpu.vector_store %arg4[%c0_52, %c0_53], %65 {strides = array<i32>} : memref<8x128xf32, #tpu.memory_space<vmem>>, vector<8x128xf32>,
    return
  }
  func.func @transform_0(%arg0: i32) -> (i32, i32, i32) {
    %c0_i32 = arith.constant 0 : i32
    %c0_i32_0 = arith.constant 0 : i32
    %c0_i32_1 = arith.constant 0 : i32
    return %arg0, %c0_i32, %c0_i32_0 : i32, i32, i32
  }
  func.func @transform_1(%arg0: i32) -> (i32, i32) {
    %c0_i32 = arith.constant 0 : i32
    %c0_i32_0 = arith.constant 0 : i32
    %c0_i32_1 = arith.constant 0 : i32
    return %c0_i32, %c0_i32_0 : i32, i32
  }
  func.func @transform_2(%arg0: i32) -> (i32, i32, i32) {
    %c0_i32 = arith.constant 0 : i32
    %c0_i32_0 = arith.constant 0 : i32
    %c0_i32_1 = arith.constant 0 : i32
    return %arg0, %c0_i32, %c0_i32_0 : i32, i32, i32
  }
}

</mosaic_0001>

<llo_original>
// kernel: tpu_custom_call.1
$region0: #{tpu_custom_call.1}
  #allocation0 [shape = 'u32[]', space=smem, size = 0x4, offset = 0x4, fixed_abs, tag = 'smem constant byte address 0x4 - core index']
  #allocation1 [shape = 'u32[144,128]{1,0:T(1,128)}', space=vmem, size = 0x12000, scoped, tag = 'internal scratch']
  #allocation2 [shape = 'f32[8,128]{1,0:T(8,128)}', space=vmem, size = 0x1000, scoped, tag = 'scratch operand']
  %s0 = inlined_call_operand.hbm [shape: f32[8,8,128], index: 0, kind: input, shape index: {}]
  %s1 = inlined_call_operand.hbm [shape: f32[128,128], index: 1, kind: input, shape index: {}]
  %s2 = inlined_call_operand.hbm [shape: f32[8,8,128], index: 2, kind: output, shape index: {}]
  %s3 = sld [smem:[#allocation0]]
  $region30: #{tpu_custom_call.1} parent=0
    _
  %s5 = ssub.s32 1, %s3
  %s6 = scalar_select 0, %s5, %s3
  $region1: #{tpu_custom_call.1} parent=0
    #allocation3 [shape = 'u8[32768]{0}', space=vmem, size = 0x8000, scoped, tag = 'input window, operand 0, single buffered']
    #allocation4 [shape = 's32[1]{0}', space=sflag, size = 0x4, scoped, tag = 'scoped memory for tpu_custom_call.1']
    #allocation5 [shape = 's32[1]{0}', space=sflag, size = 0x4, scoped, tag = 'scoped memory for tpu_custom_call.1']
    #allocation6 [shape = 'u8[65536]{0}', space=vmem, size = 0x10000, scoped, tag = 'input window, operand 1, single buffered']
    #allocation7 [shape = 's32[1]{0}', space=sflag, size = 0x4, scoped, tag = 'scoped memory for tpu_custom_call.1']
    #allocation8 [shape = 'u8[32768]{0}', space=vmem, size = 0x8000, scoped, tag = 'output window, operand 0, single buffered']
    %7 = vsyncpa [#allocation4], 0
    %8 = vsyncpa [#allocation7], 0
    %9 = vsyncpa [#allocation5], 0
    // Predicated region
    $region2: #{tpu_custom_call.1} parent=1 // pred_check
      _
    $region3: #{tpu_custom_call.1} parent=1 // pred_check_branch
      %11 = sbr.rel (0) target = $region5
    $region4: #{tpu_custom_call.1} parent=1 // pred_region
      %s13 = ssub.s32 1024, 1024
      %14 = vsyncadd [#allocation4], %s13
      %s15 = sshll.u32 [#allocation3], 4
      %s16 = int_to_ptr.vmem [resolvable:$true] %s15
      %21 = dma.hbm_to_vmem [thread:$0]  %s0, 1024, %s16, [#allocation4], 128, 128, 8
    $region5: #{tpu_custom_call.1} parent=1 // pred_fallthru
      _
    // Predicated region
    $region6: #{tpu_custom_call.1} parent=1 // pred_check
      _
    $region7: #{tpu_custom_call.1} parent=1 // pred_check_branch
      %23 = sbr.rel (0) target = $region9
    $region8: #{tpu_custom_call.1} parent=1 // pred_region
      %s25 = ssub.s32 2048, 2048
      %26 = vsyncadd [#allocation7], %s25
      %s27 = sshll.u32 [#allocation6], 4
      %s28 = int_to_ptr.vmem [resolvable:$true] %s27
      %33 = dma.hbm_to_vmem [thread:$0]  %s1, 2048, %s28, [#allocation7], 128, 128, 8
    $region9: #{tpu_custom_call.1} parent=1 // pred_fallthru
      _
    // Predicated region
    $region10: #{tpu_custom_call.1} parent=1 // pred_check
      _
    $region11: #{tpu_custom_call.1} parent=1 // pred_check_branch
      %35 = sbr.rel (0) target = $region13
    $region12: #{tpu_custom_call.1} parent=1 // pred_region
      %36 = dma.done [#allocation4], 1024
    $region13: #{tpu_custom_call.1} parent=1 // pred_fallthru
      _
    // Predicated region
    $region14: #{tpu_custom_call.1} parent=1 // pred_check
      _
    $region15: #{tpu_custom_call.1} parent=1 // pred_check_branch
      %38 = sbr.rel (0) target = $region17
    $region16: #{tpu_custom_call.1} parent=1 // pred_region
      %39 = dma.done [#allocation7], 2048
    $region17: #{tpu_custom_call.1} parent=1 // pred_fallthru
      _
    %p40 = scmp.eq.s32.totalorder 0, 0
    // Predicated region
    $region18: #{tpu_custom_call.1} parent=1 // pred_check
      %p41 = pneg %p40
    $region19: #{tpu_custom_call.1} parent=1 // pred_check_branch
      %43 = sbr.rel (%p41) target = $region21
    $region20: #{tpu_custom_call.1} parent=1 // pred_region
      %44 = vst [vmem:[#allocation2] sm:$0xff] 0.0
    $region21: #{tpu_custom_call.1} parent=1 // pred_fallthru
      _
    %v45 = vld [vmem:[#allocation6] sm:$0xff]
    %v46 = vld [vmem:[#allocation6 + $0x8] sm:$0xff]
    %v47 = vld [vmem:[#allocation6 + $0x10] sm:$0xff]
    %v48 = vld [vmem:[#allocation6 + $0x18] sm:$0xff]
    %v49 = vld [vmem:[#allocation6 + $0x20] sm:$0xff]
    %v50 = vld [vmem:[#allocation6 + $0x28] sm:$0xff]
    %v51 = vld [vmem:[#allocation6 + $0x30] sm:$0xff]
    %v52 = vld [vmem:[#allocation6 + $0x38] sm:$0xff]
    %v53 = vld [vmem:[#allocation6 + $0x40] sm:$0xff]
    %v54 = vld [vmem:[#allocation6 + $0x48] sm:$0xff]
    %v55 = vld [vmem:[#allocation6 + $0x50] sm:$0xff]
    %v56 = vld [vmem:[#allocation6 + $0x58] sm:$0xff]
    %v57 = vld [vmem:[#allocation6 + $0x60] sm:$0xff]
    %v58 = vld [vmem:[#allocation6 + $0x68] sm:$0xff]
    %v59 = vld [vmem:[#allocation6 + $0x70] sm:$0xff]
    %v60 = vld [vmem:[#allocation6 + $0x78] sm:$0xff]
    %v61 = vld [vmem:[#allocation2] sm:$0xff]
    %v62 = vld [vmem:[#allocation3] sm:$0xff]
    %63 = vmatprep.subr.mxu0 0.0
    %64 = vmatpush1.msra.mxu0 %v45
    %65 = vmatprep.subr.mxu0 0.0
    %66 = vmatpush1.msra.mxu0 %v46
    %67 = vmatprep.subr.mxu0 0.0
    %68 = vmatpush1.msra.mxu0 %v47
    %69 = vmatprep.subr.mxu0 0.0
    %70 = vmatpush1.msra.mxu0 %v48
    %71 = vmatprep.subr.mxu0 0.0
    %72 = vmatpush1.msra.mxu0 %v49
    %73 = vmatprep.subr.mxu0 0.0
    %74 = vmatpush1.msra.mxu0 %v50
    %75 = vmatprep.subr.mxu0 0.0
    %76 = vmatpush1.msra.mxu0 %v51
    %77 = vmatprep.subr.mxu0 0.0
    %78 = vmatpush1.msra.mxu0 %v52
    %79 = vmatprep.subr.mxu0 0.0
    %80 = vmatpush1.msra.mxu0 %v53
    %81 = vmatprep.subr.mxu0 0.0
    %82 = vmatpush1.msra.mxu0 %v54
    %83 = vmatprep.subr.mxu0 0.0
    %84 = vmatpush1.msra.mxu0 %v55
    %85 = vmatprep.subr.mxu0 0.0
    %86 = vmatpush1.msra.mxu0 %v56
    %87 = vmatprep.subr.mxu0 0.0
    %88 = vmatpush1.msra.mxu0 %v57
    %89 = vmatprep.subr.mxu0 0.0
    %90 = vmatpush1.msra.mxu0 %v58
    %91 = vmatprep.subr.mxu0 0.0
    %92 = vmatpush1.msra.mxu0 %v59
    %93 = vmatprep.subr.mxu0 0.0
    %94 = vmatpush1.msra.mxu0 %v60
    %95 = vmatprep.subr.mxu0 0.0
    %96 = vmatpush1.msra.mxu0 0.0
    %97 = vmatprep.subr.mxu0 0.0
    %98 = vmatpush1.msra.mxu0 0.0
    %99 = vmatprep.subr.mxu0 0.0
    %100 = vmatpush1.msra.mxu0 0.0
    %101 = vmatprep.subr.mxu0 0.0
    %102 = vmatpush1.msra.mxu0 0.0
    %103 = vmatprep.subr.mxu0 0.0
    %104 = vmatpush1.msra.mxu0 0.0
    %105 = vmatprep.subr.mxu0 0.0
    %106 = vmatpush1.msra.mxu0 0.0
    %107 = vmatprep.subr.mxu0 0.0
    %108 = vmatpush1.msra.mxu0 0.0
    %109 = vmatprep.subr.mxu0 0.0
    %110 = vmatpush1.msra.mxu0 0.0
    %111 = vmatprep.subr.mxu0 0.0
    %112 = vmatpush1.msra.mxu0 0.0
    %113 = vmatprep.subr.mxu0 0.0
    %114 = vmatpush1.msra.mxu0 0.0
    %115 = vmatprep.subr.mxu0 0.0
    %116 = vmatpush1.msra.mxu0 0.0
    %117 = vmatprep.subr.mxu0 0.0
    %118 = vmatpush1.msra.mxu0 0.0
    %119 = vmatprep.subr.mxu0 0.0
    %120 = vmatpush1.msra.mxu0 0.0
    %121 = vmatprep.subr.mxu0 0.0
    %122 = vmatpush1.msra.mxu0 0.0
    %123 = vmatprep.subr.mxu0 0.0
    %124 = vmatpush1.msra.mxu0 0.0
    %125 = vmatprep.subr.mxu0 0.0
    %126 = vmatpush1.msra.mxu0 0.0
    %127 = vmatprep.mubr.f32.mxu0 0.0
    %128 = vmatmul.mubr.f32.gmra.mrb[0].mxu0 %v61
    %v129 = vpop.f32.mrb[0].mxu0
    %v130 = vadd.f32 0.0, %v129
    %v131 = vpop.f32.mrb[0].mxu0
    %132 = vdwg.mxu0
    %v133 = vadd.f32 %v62, %v130
    %v134 = vtanh.pop %v133
    %135 = vst [vmem:[#allocation8] sm:$0xff] %v134
    %s136 = scalar_lea.vmem [#allocation3], 8
    %v137 = vld [vmem:[%s136] sm:$0xff]
    %138 = vmatprep.subr.mxu0 0.0
    %139 = vmatpush1.msra.mxu0 %v45
    %140 = vmatprep.subr.mxu0 0.0
    %141 = vmatpush1.msra.mxu0 %v46
    %142 = vmatprep.subr.mxu0 0.0
    %143 = vmatpush1.msra.mxu0 %v47
    %144 = vmatprep.subr.mxu0 0.0
    %145 = vmatpush1.msra.mxu0 %v48
    %146 = vmatprep.subr.mxu0 0.0
    %147 = vmatpush1.msra.mxu0 %v49
    %148 = vmatprep.subr.mxu0 0.0
    %149 = vmatpush1.msra.mxu0 %v50
    %150 = vmatprep.subr.mxu0 0.0
    %151 = vmatpush1.msra.mxu0 %v51
    %152 = vmatprep.subr.mxu0 0.0
    %153 = vmatpush1.msra.mxu0 %v52
    %154 = vmatprep.subr.mxu0 0.0
    %155 = vmatpush1.msra.mxu0 %v53
    %156 = vmatprep.subr.mxu0 0.0
    %157 = vmatpush1.msra.mxu0 %v54
    %158 = vmatprep.subr.mxu0 0.0
    %159 = vmatpush1.msra.mxu0 %v55
    %160 = vmatprep.subr.mxu0 0.0
    %161 = vmatpush1.msra.mxu0 %v56
    %162 = vmatprep.subr.mxu0 0.0
    %163 = vmatpush1.msra.mxu0 %v57
    %164 = vmatprep.subr.mxu0 0.0
    %165 = vmatpush1.msra.mxu0 %v58
    %166 = vmatprep.subr.mxu0 0.0
    %167 = vmatpush1.msra.mxu0 %v59
    %168 = vmatprep.subr.mxu0 0.0
    %169 = vmatpush1.msra.mxu0 %v60
    %170 = vmatprep.subr.mxu0 0.0
    %171 = vmatpush1.msra.mxu0 0.0
    %172 = vmatprep.subr.mxu0 0.0
    %173 = vmatpush1.msra.mxu0 0.0
    %174 = vmatprep.subr.mxu0 0.0
    %175 = vmatpush1.msra.mxu0 0.0
    %176 = vmatprep.subr.mxu0 0.0
    %177 = vmatpush1.msra.mxu0 0.0
    %178 = vmatprep.subr.mxu0 0.0
    %179 = vmatpush1.msra.mxu0 0.0
    %180 = vmatprep.subr.mxu0 0.0
    %181 = vmatpush1.msra.mxu0 0.0
    %182 = vmatprep.subr.mxu0 0.0
    %183 = vmatpush1.msra.mxu0 0.0
    %184 = vmatprep.subr.mxu0 0.0
    %185 = vmatpush1.msra.mxu0 0.0
    %186 = vmatprep.subr.mxu0 0.0
    %187 = vmatpush1.msra.mxu0 0.0
    %188 = vmatprep.subr.mxu0 0.0
    %189 = vmatpush1.msra.mxu0 0.0
    %190 = vmatprep.subr.mxu0 0.0
    %191 = vmatpush1.msra.mxu0 0.0
    %192 = vmatprep.subr.mxu0 0.0
    %193 = vmatpush1.msra.mxu0 0.0
    %194 = vmatprep.subr.mxu0 0.0
    %195 = vmatpush1.msra.mxu0 0.0
    %196 = vmatprep.subr.mxu0 0.0
    %197 = vmatpush1.msra.mxu0 0.0
    %198 = vmatprep.subr.mxu0 0.0
    %199 = vmatpush1.msra.mxu0 0.0
    %200 = vmatprep.subr.mxu0 0.0
    %201 = vmatpush1.msra.mxu0 0.0
    %202 = vmatprep.mubr.f32.mxu0 0.0
    %203 = vmatmul.mubr.f32.gmra.mrb[0].mxu0 %v134
    %v204 = vpop.f32.mrb[0].mxu0
    %v205 = vadd.f32 0.0, %v204
    %v206 = vpop.f32.mrb[0].mxu0
    %207 = vdwg.mxu0
    %v208 = vadd.f32 %v137, %v205
    %v209 = vtanh.pop %v208
    %s210 = scalar_lea.vmem [#allocation8], 8
    %211 = vst [vmem:[%s210] sm:$0xff] %v209
    %s212 = scalar_lea.vmem [#allocation3], 16
    %v213 = vld [vmem:[%s212] sm:$0xff]
    %214 = vmatprep.subr.mxu0 0.0
    %215 = vmatpush1.msra.mxu0 %v45
    %216 = vmatprep.subr.mxu0 0.0
    %217 = vmatpush1.msra.mxu0 %v46
    %218 = vmatprep.subr.mxu0 0.0
    %219 = vmatpush1.msra.mxu0 %v47
    %220 = vmatprep.subr.mxu0 0.0
    %221 = vmatpush1.msra.mxu0 %v48
    %222 = vmatprep.subr.mxu0 0.0
    %223 = vmatpush1.msra.mxu0 %v49
    %224 = vmatprep.subr.mxu0 0.0
    %225 = vmatpush1.msra.mxu0 %v50
    %226 = vmatprep.subr.mxu0 0.0
    %227 = vmatpush1.msra.mxu0 %v51
    %228 = vmatprep.subr.mxu0 0.0
    %229 = vmatpush1.msra.mxu0 %v52
    %230 = vmatprep.subr.mxu0 0.0
    %231 = vmatpush1.msra.mxu0 %v53
    %232 = vmatprep.subr.mxu0 0.0
    %233 = vmatpush1.msra.mxu0 %v54
    %234 = vmatprep.subr.mxu0 0.0
    %235 = vmatpush1.msra.mxu0 %v55
    %236 = vmatprep.subr.mxu0 0.0
    %237 = vmatpush1.msra.mxu0 %v56
    %238 = vmatprep.subr.mxu0 0.0
    %239 = vmatpush1.msra.mxu0 %v57
    %240 = vmatprep.subr.mxu0 0.0
    %241 = vmatpush1.msra.mxu0 %v58
    %242 = vmatprep.subr.mxu0 0.0
    %243 = vmatpush1.msra.mxu0 %v59
    %244 = vmatprep.subr.mxu0 0.0
    %245 = vmatpush1.msra.mxu0 %v60
    %246 = vmatprep.subr.mxu0 0.0
    %247 = vmatpush1.msra.mxu0 0.0
    %248 = vmatprep.subr.mxu0 0.0
    %249 = vmatpush1.msra.mxu0 0.0
    %250 = vmatprep.subr.mxu0 0.0
    %251 = vmatpush1.msra.mxu0 0.0
    %252 = vmatprep.subr.mxu0 0.0
    %253 = vmatpush1.msra.mxu0 0.0
    %254 = vmatprep.subr.mxu0 0.0
    %255 = vmatpush1.msra.mxu0 0.0
    %256 = vmatprep.subr.mxu0 0.0
    %257 = vmatpush1.msra.mxu0 0.0
    %258 = vmatprep.subr.mxu0 0.0
    %259 = vmatpush1.msra.mxu0 0.0
    %260 = vmatprep.subr.mxu0 0.0
    %261 = vmatpush1.msra.mxu0 0.0
    %262 = vmatprep.subr.mxu0 0.0
    %263 = vmatpush1.msra.mxu0 0.0
    %264 = vmatprep.subr.mxu0 0.0
    %265 = vmatpush1.msra.mxu0 0.0
    %266 = vmatprep.subr.mxu0 0.0
    %267 = vmatpush1.msra.mxu0 0.0
    %268 = vmatprep.subr.mxu0 0.0
    %269 = vmatpush1.msra.mxu0 0.0
    %270 = vmatprep.subr.mxu0 0.0
    %271 = vmatpush1.msra.mxu0 0.0
    %272 = vmatprep.subr.mxu0 0.0
    %273 = vmatpush1.msra.mxu0 0.0
    %274 = vmatprep.subr.mxu0 0.0
    %275 = vmatpush1.msra.mxu0 0.0
    %276 = vmatprep.subr.mxu0 0.0
    %277 = vmatpush1.msra.mxu0 0.0
    %278 = vmatprep.mubr.f32.mxu0 0.0
    %279 = vmatmul.mubr.f32.gmra.mrb[0].mxu0 %v209
    %v280 = vpop.f32.mrb[0].mxu0
    %v281 = vadd.f32 0.0, %v280
    %v282 = vpop.f32.mrb[0].mxu0
    %283 = vdwg.mxu0
    %v284 = vadd.f32 %v213, %v281
    %v285 = vtanh.pop %v284
    %s286 = scalar_lea.vmem [#allocation8], 16
    %287 = vst [vmem:[%s286] sm:$0xff] %v285
    %s288 = scalar_lea.vmem [#allocation3], 24
    %v289 = vld [vmem:[%s288] sm:$0xff]
    %290 = vmatprep.subr.mxu0 0.0
    %291 = vmatpush1.msra.mxu0 %v45
    %292 = vmatprep.subr.mxu0 0.0
    %293 = vmatpush1.msra.mxu0 %v46
    %294 = vmatprep.subr.mxu0 0.0
    %295 = vmatpush1.msra.mxu0 %v47
    %296 = vmatprep.subr.mxu0 0.0
    %297 = vmatpush1.msra.mxu0 %v48
    %298 = vmatprep.subr.mxu0 0.0
    %299 = vmatpush1.msra.mxu0 %v49
    %300 = vmatprep.subr.mxu0 0.0
    %301 = vmatpush1.msra.mxu0 %v50
    %302 = vmatprep.subr.mxu0 0.0
    %303 = vmatpush1.msra.mxu0 %v51
    %304 = vmatprep.subr.mxu0 0.0
    %305 = vmatpush1.msra.mxu0 %v52
    %306 = vmatprep.subr.mxu0 0.0
    %307 = vmatpush1.msra.mxu0 %v53
    %308 = vmatprep.subr.mxu0 0.0
    %309 = vmatpush1.msra.mxu0 %v54
    %310 = vmatprep.subr.mxu0 0.0
    %311 = vmatpush1.msra.mxu0 %v55
    %312 = vmatprep.subr.mxu0 0.0
    %313 = vmatpush1.msra.mxu0 %v56
    %314 = vmatprep.subr.mxu0 0.0
    %315 = vmatpush1.msra.mxu0 %v57
    %316 = vmatprep.subr.mxu0 0.0
    %317 = vmatpush1.msra.mxu0 %v58
    %318 = vmatprep.subr.mxu0 0.0
    %319 = vmatpush1.msra.mxu0 %v59
    %320 = vmatprep.subr.mxu0 0.0
    %321 = vmatpush1.msra.mxu0 %v60
    %322 = vmatprep.subr.mxu0 0.0
    %323 = vmatpush1.msra.mxu0 0.0
    %324 = vmatprep.subr.mxu0 0.0
    %325 = vmatpush1.msra.mxu0 0.0
    %326 = vmatprep.subr.mxu0 0.0
    %327 = vmatpush1.msra.mxu0 0.0
    %328 = vmatprep.subr.mxu0 0.0
    %329 = vmatpush1.msra.mxu0 0.0
    %330 = vmatprep.subr.mxu0 0.0
    %331 = vmatpush1.msra.mxu0 0.0
    %332 = vmatprep.subr.mxu0 0.0
    %333 = vmatpush1.msra.mxu0 0.0
    %334 = vmatprep.subr.mxu0 0.0
    %335 = vmatpush1.msra.mxu0 0.0
    %336 = vmatprep.subr.mxu0 0.0
    %337 = vmatpush1.msra.mxu0 0.0
    %338 = vmatprep.subr.mxu0 0.0
    %339 = vmatpush1.msra.mxu0 0.0
    %340 = vmatprep.subr.mxu0 0.0
    %341 = vmatpush1.msra.mxu0 0.0
    %342 = vmatprep.subr.mxu0 0.0
    %343 = vmatpush1.msra.mxu0 0.0
    %344 = vmatprep.subr.mxu0 0.0
    %345 = vmatpush1.msra.mxu0 0.0
    %346 = vmatprep.subr.mxu0 0.0
    %347 = vmatpush1.msra.mxu0 0.0
    %348 = vmatprep.subr.mxu0 0.0
    %349 = vmatpush1.msra.mxu0 0.0
    %350 = vmatprep.subr.mxu0 0.0
    %351 = vmatpush1.msra.mxu0 0.0
    %352 = vmatprep.subr.mxu0 0.0
    %353 = vmatpush1.msra.mxu0 0.0
    %354 = vmatprep.mubr.f32.mxu0 0.0
    %355 = vmatmul.mubr.f32.gmra.mrb[0].mxu0 %v285
    %v356 = vpop.f32.mrb[0].mxu0
    %v357 = vadd.f32 0.0, %v356
    %v358 = vpop.f32.mrb[0].mxu0
    %359 = vdwg.mxu0
    %v360 = vadd.f32 %v289, %v357
    %v361 = vtanh.pop %v360
    %s362 = scalar_lea.vmem [#allocation8], 24
    %363 = vst [vmem:[%s362] sm:$0xff] %v361
    %s364 = scalar_lea.vmem [#allocation3], 32
    %v365 = vld [vmem:[%s364] sm:$0xff]
    %366 = vmatprep.subr.mxu0 0.0
    %367 = vmatpush1.msra.mxu0 %v45
    %368 = vmatprep.subr.mxu0 0.0
    %369 = vmatpush1.msra.mxu0 %v46
    %370 = vmatprep.subr.mxu0 0.0
    %371 = vmatpush1.msra.mxu0 %v47
    %372 = vmatprep.subr.mxu0 0.0
    %373 = vmatpush1.msra.mxu0 %v48
    %374 = vmatprep.subr.mxu0 0.0
    %375 = vmatpush1.msra.mxu0 %v49
    %376 = vmatprep.subr.mxu0 0.0
    %377 = vmatpush1.msra.mxu0 %v50
    %378 = vmatprep.subr.mxu0 0.0
    %379 = vmatpush1.msra.mxu0 %v51
    %380 = vmatprep.subr.mxu0 0.0
    %381 = vmatpush1.msra.mxu0 %v52
    %382 = vmatprep.subr.mxu0 0.0
    %383 = vmatpush1.msra.mxu0 %v53
    %384 = vmatprep.subr.mxu0 0.0
    %385 = vmatpush1.msra.mxu0 %v54
    %386 = vmatprep.subr.mxu0 0.0
    %387 = vmatpush1.msra.mxu0 %v55
    %388 = vmatprep.subr.mxu0 0.0
    %389 = vmatpush1.msra.mxu0 %v56
    %390 = vmatprep.subr.mxu0 0.0
    %391 = vmatpush1.msra.mxu0 %v57
    %392 = vmatprep.subr.mxu0 0.0
    %393 = vmatpush1.msra.mxu0 %v58
    %394 = vmatprep.subr.mxu0 0.0
    %395 = vmatpush1.msra.mxu0 %v59
    %396 = vmatprep.subr.mxu0 0.0
    %397 = vmatpush1.msra.mxu0 %v60
    %398 = vmatprep.subr.mxu0 0.0
    %399 = vmatpush1.msra.mxu0 0.0
    %400 = vmatprep.subr.mxu0 0.0
    %401 = vmatpush1.msra.mxu0 0.0
    %402 = vmatprep.subr.mxu0 0.0
    %403 = vmatpush1.msra.mxu0 0.0
    %404 = vmatprep.subr.mxu0 0.0
    %405 = vmatpush1.msra.mxu0 0.0
    %406 = vmatprep.subr.mxu0 0.0
    %407 = vmatpush1.msra.mxu0 0.0
    %408 = vmatprep.subr.mxu0 0.0
    %409 = vmatpush1.msra.mxu0 0.0
    %410 = vmatprep.subr.mxu0 0.0
    %411 = vmatpush1.msra.mxu0 0.0
    %412 = vmatprep.subr.mxu0 0.0
    %413 = vmatpush1.msra.mxu0 0.0
    %414 = vmatprep.subr.mxu0 0.0
    %415 = vmatpush1.msra.mxu0 0.0
    %416 = vmatprep.subr.mxu0 0.0
    %417 = vmatpush1.msra.mxu0 0.0
    %418 = vmatprep.subr.mxu0 0.0
    %419 = vmatpush1.msra.mxu0 0.0
    %420 = vmatprep.subr.mxu0 0.0
    %421 = vmatpush1.msra.mxu0 0.0
    %422 = vmatprep.subr.mxu0 0.0
    %423 = vmatpush1.msra.mxu0 0.0
    %424 = vmatprep.subr.mxu0 0.0
    %425 = vmatpush1.msra.mxu0 0.0
    %426 = vmatprep.subr.mxu0 0.0
    %427 = vmatpush1.msra.mxu0 0.0
    %428 = vmatprep.subr.mxu0 0.0
    %429 = vmatpush1.msra.mxu0 0.0
    %430 = vmatprep.mubr.f32.mxu0 0.0
    %431 = vmatmul.mubr.f32.gmra.mrb[0].mxu0 %v361
    %v432 = vpop.f32.mrb[0].mxu0
    %v433 = vadd.f32 0.0, %v432
    %v434 = vpop.f32.mrb[0].mxu0
    %435 = vdwg.mxu0
    %v436 = vadd.f32 %v365, %v433
    %v437 = vtanh.pop %v436
    %s438 = scalar_lea.vmem [#allocation8], 32
    %439 = vst [vmem:[%s438] sm:$0xff] %v437
    %s440 = scalar_lea.vmem [#allocation3], 40
    %v441 = vld [vmem:[%s440] sm:$0xff]
    %442 = vmatprep.subr.mxu0 0.0
    %443 = vmatpush1.msra.mxu0 %v45
    %444 = vmatprep.subr.mxu0 0.0
    %445 = vmatpush1.msra.mxu0 %v46
    %446 = vmatprep.subr.mxu0 0.0
    %447 = vmatpush1.msra.mxu0 %v47
    %448 = vmatprep.subr.mxu0 0.0
    %449 = vmatpush1.msra.mxu0 %v48
    %450 = vmatprep.subr.mxu0 0.0
    %451 = vmatpush1.msra.mxu0 %v49
    %452 = vmatprep.subr.mxu0 0.0
    %453 = vmatpush1.msra.mxu0 %v50
    %454 = vmatprep.subr.mxu0 0.0
    %455 = vmatpush1.msra.mxu0 %v51
    %456 = vmatprep.subr.mxu0 0.0
    %457 = vmatpush1.msra.mxu0 %v52
    %458 = vmatprep.subr.mxu0 0.0
    %459 = vmatpush1.msra.mxu0 %v53
    %460 = vmatprep.subr.mxu0 0.0
    %461 = vmatpush1.msra.mxu0 %v54
    %462 = vmatprep.subr.mxu0 0.0
    %463 = vmatpush1.msra.mxu0 %v55
    %464 = vmatprep.subr.mxu0 0.0
    %465 = vmatpush1.msra.mxu0 %v56
    %466 = vmatprep.subr.mxu0 0.0
    %467 = vmatpush1.msra.mxu0 %v57
    %468 = vmatprep.subr.mxu0 0.0
    %469 = vmatpush1.msra.mxu0 %v58
    %470 = vmatprep.subr.mxu0 0.0
    %471 = vmatpush1.msra.mxu0 %v59
    %472 = vmatprep.subr.mxu0 0.0
    %473 = vmatpush1.msra.mxu0 %v60
    %474 = vmatprep.subr.mxu0 0.0
    %475 = vmatpush1.msra.mxu0 0.0
    %476 = vmatprep.subr.mxu0 0.0
    %477 = vmatpush1.msra.mxu0 0.0
    %478 = vmatprep.subr.mxu0 0.0
    %479 = vmatpush1.msra.mxu0 0.0
    %480 = vmatprep.subr.mxu0 0.0
    %481 = vmatpush1.msra.mxu0 0.0
    %482 = vmatprep.subr.mxu0 0.0
    %483 = vmatpush1.msra.mxu0 0.0
    %484 = vmatprep.subr.mxu0 0.0
    %485 = vmatpush1.msra.mxu0 0.0
    %486 = vmatprep.subr.mxu0 0.0
    %487 = vmatpush1.msra.mxu0 0.0
    %488 = vmatprep.subr.mxu0 0.0
    %489 = vmatpush1.msra.mxu0 0.0
    %490 = vmatprep.subr.mxu0 0.0
    %491 = vmatpush1.msra.mxu0 0.0
    %492 = vmatprep.subr.mxu0 0.0
    %493 = vmatpush1.msra.mxu0 0.0
    %494 = vmatprep.subr.mxu0 0.0
    %495 = vmatpush1.msra.mxu0 0.0
    %496 = vmatprep.subr.mxu0 0.0
    %497 = vmatpush1.msra.mxu0 0.0
    %498 = vmatprep.subr.mxu0 0.0
    %499 = vmatpush1.msra.mxu0 0.0
    %500 = vmatprep.subr.mxu0 0.0
    %501 = vmatpush1.msra.mxu0 0.0
    %502 = vmatprep.subr.mxu0 0.0
    %503 = vmatpush1.msra.mxu0 0.0
    %504 = vmatprep.subr.mxu0 0.0
    %505 = vmatpush1.msra.mxu0 0.0
    %506 = vmatprep.mubr.f32.mxu0 0.0
    %507 = vmatmul.mubr.f32.gmra.mrb[0].mxu0 %v437
    %v508 = vpop.f32.mrb[0].mxu0
    %v509 = vadd.f32 0.0, %v508
    %v510 = vpop.f32.mrb[0].mxu0
    %511 = vdwg.mxu0
    %v512 = vadd.f32 %v441, %v509
    %v513 = vtanh.pop %v512
    %s514 = scalar_lea.vmem [#allocation8], 40
    %515 = vst [vmem:[%s514] sm:$0xff] %v513
    %s516 = scalar_lea.vmem [#allocation3], 48
    %v517 = vld [vmem:[%s516] sm:$0xff]
    %518 = vmatprep.subr.mxu0 0.0
    %519 = vmatpush1.msra.mxu0 %v45
    %520 = vmatprep.subr.mxu0 0.0
    %521 = vmatpush1.msra.mxu0 %v46
    %522 = vmatprep.subr.mxu0 0.0
    %523 = vmatpush1.msra.mxu0 %v47
    %524 = vmatprep.subr.mxu0 0.0
    %525 = vmatpush1.msra.mxu0 %v48
    %526 = vmatprep.subr.mxu0 0.0
    %527 = vmatpush1.msra.mxu0 %v49
    %528 = vmatprep.subr.mxu0 0.0
    %529 = vmatpush1.msra.mxu0 %v50
    %530 = vmatprep.subr.mxu0 0.0
    %531 = vmatpush1.msra.mxu0 %v51
    %532 = vmatprep.subr.mxu0 0.0
    %533 = vmatpush1.msra.mxu0 %v52
    %534 = vmatprep.subr.mxu0 0.0
    %535 = vmatpush1.msra.mxu0 %v53
    %536 = vmatprep.subr.mxu0 0.0
    %537 = vmatpush1.msra.mxu0 %v54
    %538 = vmatprep.subr.mxu0 0.0
    %539 = vmatpush1.msra.mxu0 %v55
    %540 = vmatprep.subr.mxu0 0.0
    %541 = vmatpush1.msra.mxu0 %v56
    %542 = vmatprep.subr.mxu0 0.0
    %543 = vmatpush1.msra.mxu0 %v57
    %544 = vmatprep.subr.mxu0 0.0
    %545 = vmatpush1.msra.mxu0 %v58
    %546 = vmatprep.subr.mxu0 0.0
    %547 = vmatpush1.msra.mxu0 %v59
    %548 = vmatprep.subr.mxu0 0.0
    %549 = vmatpush1.msra.mxu0 %v60
    %550 = vmatprep.subr.mxu0 0.0
    %551 = vmatpush1.msra.mxu0 0.0
    %552 = vmatprep.subr.mxu0 0.0
    %553 = vmatpush1.msra.mxu0 0.0
    %554 = vmatprep.subr.mxu0 0.0
    %555 = vmatpush1.msra.mxu0 0.0
    %556 = vmatprep.subr.mxu0 0.0
    %557 = vmatpush1.msra.mxu0 0.0
    %558 = vmatprep.subr.mxu0 0.0
    %559 = vmatpush1.msra.mxu0 0.0
    %560 = vmatprep.subr.mxu0 0.0
    %561 = vmatpush1.msra.mxu0 0.0
    %562 = vmatprep.subr.mxu0 0.0
    %563 = vmatpush1.msra.mxu0 0.0
    %564 = vmatprep.subr.mxu0 0.0
    %565 = vmatpush1.msra.mxu0 0.0
    %566 = vmatprep.subr.mxu0 0.0
    %567 = vmatpush1.msra.mxu0 0.0
    %568 = vmatprep.subr.mxu0 0.0
    %569 = vmatpush1.msra.mxu0 0.0
    %570 = vmatprep.subr.mxu0 0.0
    %571 = vmatpush1.msra.mxu0 0.0
    %572 = vmatprep.subr.mxu0 0.0
    %573 = vmatpush1.msra.mxu0 0.0
    %574 = vmatprep.subr.mxu0 0.0
    %575 = vmatpush1.msra.mxu0 0.0
    %576 = vmatprep.subr.mxu0 0.0
    %577 = vmatpush1.msra.mxu0 0.0
    %578 = vmatprep.subr.mxu0 0.0
    %579 = vmatpush1.msra.mxu0 0.0
    %580 = vmatprep.subr.mxu0 0.0
    %581 = vmatpush1.msra.mxu0 0.0
    %582 = vmatprep.mubr.f32.mxu0 0.0
    %583 = vmatmul.mubr.f32.gmra.mrb[0].mxu0 %v513
    %v584 = vpop.f32.mrb[0].mxu0
    %v585 = vadd.f32 0.0, %v584
    %v586 = vpop.f32.mrb[0].mxu0
    %587 = vdwg.mxu0
    %v588 = vadd.f32 %v517, %v585
    %v589 = vtanh.pop %v588
    %s590 = scalar_lea.vmem [#allocation8], 48
    %591 = vst [vmem:[%s590] sm:$0xff] %v589
    %s592 = scalar_lea.vmem [#allocation3], 56
    %v593 = vld [vmem:[%s592] sm:$0xff]
    %594 = vmatprep.subr.mxu0 0.0
    %595 = vmatpush1.msra.mxu0 %v45
    %596 = vmatprep.subr.mxu0 0.0
    %597 = vmatpush1.msra.mxu0 %v46
    %598 = vmatprep.subr.mxu0 0.0
    %599 = vmatpush1.msra.mxu0 %v47
    %600 = vmatprep.subr.mxu0 0.0
    %601 = vmatpush1.msra.mxu0 %v48
    %602 = vmatprep.subr.mxu0 0.0
    %603 = vmatpush1.msra.mxu0 %v49
    %604 = vmatprep.subr.mxu0 0.0
    %605 = vmatpush1.msra.mxu0 %v50
    %606 = vmatprep.subr.mxu0 0.0
    %607 = vmatpush1.msra.mxu0 %v51
    %608 = vmatprep.subr.mxu0 0.0
    %609 = vmatpush1.msra.mxu0 %v52
    %610 = vmatprep.subr.mxu0 0.0
    %611 = vmatpush1.msra.mxu0 %v53
    %612 = vmatprep.subr.mxu0 0.0
    %613 = vmatpush1.msra.mxu0 %v54
    %614 = vmatprep.subr.mxu0 0.0
    %615 = vmatpush1.msra.mxu0 %v55
    %616 = vmatprep.subr.mxu0 0.0
    %617 = vmatpush1.msra.mxu0 %v56
    %618 = vmatprep.subr.mxu0 0.0
    %619 = vmatpush1.msra.mxu0 %v57
    %620 = vmatprep.subr.mxu0 0.0
    %621 = vmatpush1.msra.mxu0 %v58
    %622 = vmatprep.subr.mxu0 0.0
    %623 = vmatpush1.msra.mxu0 %v59
    %624 = vmatprep.subr.mxu0 0.0
    %625 = vmatpush1.msra.mxu0 %v60
    %626 = vmatprep.subr.mxu0 0.0
    %627 = vmatpush1.msra.mxu0 0.0
    %628 = vmatprep.subr.mxu0 0.0
    %629 = vmatpush1.msra.mxu0 0.0
    %630 = vmatprep.subr.mxu0 0.0
    %631 = vmatpush1.msra.mxu0 0.0
    %632 = vmatprep.subr.mxu0 0.0
    %633 = vmatpush1.msra.mxu0 0.0
    %634 = vmatprep.subr.mxu0 0.0
    %635 = vmatpush1.msra.mxu0 0.0
    %636 = vmatprep.subr.mxu0 0.0
    %637 = vmatpush1.msra.mxu0 0.0
    %638 = vmatprep.subr.mxu0 0.0
    %639 = vmatpush1.msra.mxu0 0.0
    %640 = vmatprep.subr.mxu0 0.0
    %641 = vmatpush1.msra.mxu0 0.0
    %642 = vmatprep.subr.mxu0 0.0
    %643 = vmatpush1.msra.mxu0 0.0
    %644 = vmatprep.subr.mxu0 0.0
    %645 = vmatpush1.msra.mxu0 0.0
    %646 = vmatprep.subr.mxu0 0.0
    %647 = vmatpush1.msra.mxu0 0.0
    %648 = vmatprep.subr.mxu0 0.0
    %649 = vmatpush1.msra.mxu0 0.0
    %650 = vmatprep.subr.mxu0 0.0
    %651 = vmatpush1.msra.mxu0 0.0
    %652 = vmatprep.subr.mxu0 0.0
    %653 = vmatpush1.msra.mxu0 0.0
    %654 = vmatprep.subr.mxu0 0.0
    %655 = vmatpush1.msra.mxu0 0.0
    %656 = vmatprep.subr.mxu0 0.0
    %657 = vmatpush1.msra.mxu0 0.0
    %658 = vmatprep.mubr.f32.mxu0 0.0
    %659 = vmatmul.mubr.f32.gmra.mrb[0].mxu0 %v589
    %v660 = vpop.f32.mrb[0].mxu0
    %v661 = vadd.f32 0.0, %v660
    %v662 = vpop.f32.mrb[0].mxu0
    %663 = vdwg.mxu0
    %v664 = vadd.f32 %v593, %v661
    %v665 = vtanh.pop %v664
    %s666 = scalar_lea.vmem [#allocation8], 56
    %667 = vst [vmem:[%s666] sm:$0xff] %v665
    %668 = vst [vmem:[#allocation2] sm:$0xff] %v665
    // Predicated region
    $region22: #{tpu_custom_call.1} parent=1 // pred_check
      _
    $region23: #{tpu_custom_call.1} parent=1 // pred_check_branch
      %670 = sbr.rel (0) target = $region25
    $region24: #{tpu_custom_call.1} parent=1 // pred_region
      %s672 = ssub.s32 1024, 1024
      %673 = vsyncadd [#allocation5], %s672
      %s674 = sshll.u32 [#allocation8], 4
      %s675 = int_to_ptr.vmem [resolvable:$true] %s674
      %680 = dma.vmem_to_hbm [thread:$0]  %s675, 1024, %s2, [#allocation5], 128, 128, 8
    $region25: #{tpu_custom_call.1} parent=1 // pred_fallthru
      _
    // Predicated region
    $region26: #{tpu_custom_call.1} parent=1 // pred_check
      _
    $region27: #{tpu_custom_call.1} parent=1 // pred_check_branch
      %682 = sbr.rel (0) target = $region29
    $region28: #{tpu_custom_call.1} parent=1 // pred_region
      %683 = dma.done [#allocation5], 1024
    $region29: #{tpu_custom_call.1} parent=1 // pred_fallthru
      _
    %684 = vsyncpa [#allocation4], 1
    %685 = vsyncpa [#allocation7], 1
    %686 = vsyncpa [#allocation5], 1

</llo_original>
